<compile_context>
chip_gen: v7x
topology: tpu7x:2x2x1
jax: 0.10.0
libtpu: 0.0.40
codegen_flags: <defaults>
</compile_context>

<pallas_src>
import jax
import jax.numpy as jnp
from jax.experimental import pallas as pl
from jax.experimental.pallas import tpu as pltpu

_LANE = 128


def _sublane_multiple(dtype) -> int:
    # 8 for 4-byte dtypes, 16 for 2-byte, 32 for 1-byte.
    itemsize = jnp.dtype(dtype).itemsize
    return max(8, 32 // max(itemsize, 1))


def _chip_config():
    """Best-effort chip detection -> (num_tensorcores, block_bytes_per_buffer)."""
    kind = ""
    try:
        kind = jax.devices()[0].device_kind.lower()
    except Exception:
        pass
    if "v7" in kind or "tpu7" in kind or "7x" in kind:
        # 2 TensorCores/chip, 3.2 TB/s HBM -> bigger blocks, balanced grid.
        return 2, 4 * 1024 * 1024
    if "v5" in kind:
        # 1 TC, 16 MiB scoped-VMEM default -> 3 MiB/buffer (12 MiB total).
        return 1, 3 * 1024 * 1024
    if "v6" in kind or "tpu6" in kind:
        # 1 TC, measured-good ~2 MiB block regime.
        return 1, 2 * 1024 * 1024
    # Unknown part: conservative.
    return 1, 2 * 1024 * 1024


def _make_kernel(bound):
    """Kernel with the static bound baked in as a closure constant."""

    def kernel(x_ref, o_ref):
        x = x_ref[...]
        zero = jnp.zeros((), dtype=x.dtype)
        b = jnp.asarray(bound, dtype=x.dtype)
        # torch: output = x; output[x > bound] = 0; out = max(0, output)
        o_ref[...] = jnp.where(x > b, zero, jnp.maximum(x, zero))

    return kernel


def _run_2d(x2d: jax.Array, bound: float, donate: bool) -> jax.Array:
    rows, lane = x2d.shape
    dtype = x2d.dtype
    sub = _sublane_multiple(dtype)
    itemsize = jnp.dtype(dtype).itemsize
    num_cores, block_bytes = _chip_config()

    # Target rows per block (~block_bytes per buffer), rounded to the sublane
    # multiple for this dtype.
    target_rows = max(sub, block_bytes // (lane * itemsize))
    target_rows = max(sub, (target_rows // sub) * sub)

    if rows <= target_rows:
        if num_cores >= 2 and rows >= 2 * sub:
            # 2-TC chip: split into exactly 2 blocks so both cores get work.
            block_rows = ((pl.cdiv(rows, 2) + sub - 1) // sub) * sub
            block_rows = min(block_rows, rows)
        else:
            # Single-TC chip or tiny array: one block equal to the full array
            # dims (always legal), no serial-loop overhead.
            block_rows = rows
    else:
        block_rows = target_rows
        if num_cores >= 2:
            g = pl.cdiv(rows, block_rows)
            if g > 1 and g <= 8 and (g % 2 == 1):
                # Rebalance small odd grids to an even block count so the two
                # TensorCores finish together (best effort).
                br = ((pl.cdiv(rows, g + 1) + sub - 1) // sub) * sub
                if br >= sub:
                    block_rows = br

    grid = (pl.cdiv(rows, block_rows),)

    n = rows * lane
    cost = pl.CostEstimate(
        flops=3 * n,               # compare + select + max per element
        transcendentals=0,
        bytes_accessed=2 * n * itemsize,   # 1 read + 1 write
    )

    extra = {}
    if donate:
        # Only safe if the caller never reuses the input afterwards.  Saves
        # HBM footprint; does not change traffic.
        extra["input_output_aliases"] = {0: 0}

    return pl.pallas_call(
        _make_kernel(bound),
        out_shape=jax.ShapeDtypeStruct((rows, lane), dtype),
        grid=grid,
        in_specs=[pl.BlockSpec((block_rows, lane), lambda i: (i, 0))],
        out_specs=pl.BlockSpec((block_rows, lane), lambda i: (i, 0)),
        compiler_params=pltpu.CompilerParams(
            dimension_semantics=("parallel",),
        ),
        cost_estimate=cost,
        **extra,
    )(x2d)


def bounded_relu_zero(x: jax.Array, bounds: float, *, donate: bool = False) -> jax.Array:
    """Elementwise bounded ReLU (values above `bounds` are sent back to zero).

    Note: `bounds` is cast to the input dtype inside the kernel, so for bf16
    inputs the threshold is rounded to bf16 (matches torch type promotion of a
    python scalar against a bf16 tensor closely enough for this use).
    """
    orig_shape = x.shape
    n = x.size
    if n == 0:
        return x

    if n % _LANE == 0:
        # Common case (NCHW conv activations): zero-copy reshape to a
        # lane-dense (rows, 128) view; exactly one HBM read + one write.
        x2d = x.reshape(n // _LANE, _LANE)
        out2d = _run_2d(x2d, bounds, donate)
        return out2d.reshape(orig_shape)

    # Ragged element count: a single fused jnp expression is one read + one
    # write of HBM (same bandwidth the kernel achieves) and avoids the old
    # kernel-head + concatenate path that doubled traffic on the head.
    zero = jnp.zeros((), dtype=x.dtype)
    b = jnp.asarray(bounds, dtype=x.dtype)
    return jnp.maximum(zero, jnp.where(x > b, zero, x))


if __name__ == "__main__":
    key = jax.random.PRNGKey(0)
    # NCHW activation, like the PyTorch conv feature maps this module wraps.
    x = jax.random.normal(key, (2, 4, 16, 16), dtype=jnp.float32) * 2.0
    bounds = 1.0  # static "parameter" from __init__

    out = bounded_relu_zero(x, bounds)
    out = jax.block_until_ready(out)

    # Pure-JAX reference of the PyTorch forward.
    ref = jnp.maximum(0.0, jnp.where(x > bounds, 0.0, x))

    assert out.shape == x.shape and out.dtype == x.dtype
    assert jnp.allclose(out, ref), "mismatch vs reference"

    # Ragged (non-multiple-of-128) shape exercises the fused-jnp fallback.
    x2 = jax.random.normal(jax.random.PRNGKey(1), (3, 5, 7, 11), dtype=jnp.float32) * 2.0
    out2 = jax.block_until_ready(bounded_relu_zero(x2, bounds))
    ref2 = jnp.maximum(0.0, jnp.where(x2 > bounds, 0.0, x2))
    assert out2.shape == x2.shape and out2.dtype == x2.dtype
    assert jnp.allclose(out2, ref2), "mismatch vs reference (ragged shape)"

    # Larger multiple-of-128 shape to exercise the multi-block grid path.
    x3 = jax.random.normal(jax.random.PRNGKey(2), (8, 64, 32, 32), dtype=jnp.float32) * 2.0
    out3 = jax.block_until_ready(bounded_relu_zero(x3, bounds))
    ref3 = jnp.maximum(0.0, jnp.where(x3 > bounds, 0.0, x3))
    assert jnp.allclose(out3, ref3), "mismatch vs reference (large shape)"

    print("KERNEL_OK")
</pallas_src>

<mosaic_0001>
module attributes {stable_mosaic.version = 11 : i64} {
  func.func @kernel(%arg0: i32, %arg1: memref<16x128xf32, #tpu.memory_space<vmem>>, %arg2: memref<16x128xf32, #tpu.memory_space<vmem>>) attributes {dimension_semantics = [#tpu.dimension_semantics<parallel>], iteration_bounds = array<i64: 1>, scalar_prefetch = 0 : i64, scratch_operands = 0 : i64, tpu.core_type = #tpu.core_type<tc>, window_params = [{transform_indices = @transform_0, window_bounds = array<i64: 16, 128>}, {transform_indices = @transform_1, window_bounds = array<i64: 16, 128>}]} {
    %c0 = arith.constant 0 : index
    %c0_0 = arith.constant 0 : index
    %0 = vector.load %arg1[%c0, %c0_0] : memref<16x128xf32, #tpu.memory_space<vmem>>, vector<16x128xf32>
    %cst = arith.constant 1.000000e+00 : f32
    %1 = vector.broadcast %cst : f32 to vector<16x128xf32>
    %2 = arith.cmpf ogt, %0, %1 : vector<16x128xf32>
    %cst_1 = arith.constant 0.000000e+00 : f32
    %3 = vector.broadcast %cst_1 : f32 to vector<16x128xf32>
    %4 = arith.maximumf %0, %3 : vector<16x128xf32>
    %cst_2 = arith.constant 0.000000e+00 : f32
    %5 = vector.broadcast %cst_2 : f32 to vector<16x128xf32>
    %6 = arith.select %2, %5, %4 : vector<16x128xi1>, vector<16x128xf32>
    %c0_3 = arith.constant 0 : index
    %c0_4 = arith.constant 0 : index
    %7 = vector.load %arg2[%c0_3, %c0_4] : memref<16x128xf32, #tpu.memory_space<vmem>>, vector<16x128xf32>
    tpu.vector_store %arg2[%c0_3, %c0_4], %6 {strides = array<i32>} : memref<16x128xf32, #tpu.memory_space<vmem>>, vector<16x128xf32>,
    return
  }
  func.func @transform_0(%arg0: i32) -> (i32, i32) {
    %c0_i32 = arith.constant 0 : i32
    %c0_i32_0 = arith.constant 0 : i32
    return %arg0, %c0_i32 : i32, i32
  }
  func.func @transform_1(%arg0: i32) -> (i32, i32) {
    %c0_i32 = arith.constant 0 : i32
    %c0_i32_0 = arith.constant 0 : i32
    return %arg0, %c0_i32 : i32, i32
  }
}

</mosaic_0001>

<llo_original>
// kernel: tpu_custom_call.1
$region0: #{tpu_custom_call.1}
  #allocation0 [shape = 'u32[]', space=smem, size = 0x4, offset = 0x4, fixed_abs, tag = 'smem constant byte address 0x4 - core index']
  #allocation1 [shape = 'u32[144,128]{1,0:T(1,128)}', space=vmem, size = 0x12000, scoped, tag = 'internal scratch']
  %s0 = inlined_call_operand.hbm [shape: f32[16,128], index: 0, kind: input, shape index: {}]
  %s1 = inlined_call_operand.hbm [shape: f32[16,128], index: 1, kind: output, shape index: {}]
  %s2 = sld [smem:[#allocation0]]
  $region18: #{tpu_custom_call.1} parent=0
    _
  %s4 = ssub.s32 1, %s2
  %s5 = scalar_select 0, %s4, %s2
  $region1: #{tpu_custom_call.1} parent=0
    #allocation2 [shape = 'u8[8192]{0}', space=vmem, size = 0x2000, scoped, tag = 'input window, operand 0, single buffered']
    #allocation3 [shape = 's32[1]{0}', space=sflag, size = 0x4, scoped, tag = 'scoped memory for tpu_custom_call.1']
    #allocation4 [shape = 's32[1]{0}', space=sflag, size = 0x4, scoped, tag = 'scoped memory for tpu_custom_call.1']
    #allocation5 [shape = 'u8[8192]{0}', space=vmem, size = 0x2000, scoped, tag = 'output window, operand 0, single buffered']
    %6 = vsyncpa [#allocation3], 0
    %7 = vsyncpa [#allocation4], 0
    // Predicated region
    $region2: #{tpu_custom_call.1} parent=1 // pred_check
      _
    $region3: #{tpu_custom_call.1} parent=1 // pred_check_branch
      %9 = sbr.rel (0) target = $region5
    $region4: #{tpu_custom_call.1} parent=1 // pred_region
      %s11 = ssub.s32 256, 256
      %12 = vsyncadd [#allocation3], %s11
      %s13 = sshll.u32 [#allocation2], 4
      %s14 = int_to_ptr.vmem [resolvable:$true] %s13
      %19 = dma.hbm_to_vmem [thread:$0]  %s0, 256, %s14, [#allocation3], 128, 128, 8
    $region5: #{tpu_custom_call.1} parent=1 // pred_fallthru
      _
    // Predicated region
    $region6: #{tpu_custom_call.1} parent=1 // pred_check
      _
    $region7: #{tpu_custom_call.1} parent=1 // pred_check_branch
      %21 = sbr.rel (0) target = $region9
    $region8: #{tpu_custom_call.1} parent=1 // pred_region
      %22 = dma.done [#allocation3], 256
    $region9: #{tpu_custom_call.1} parent=1 // pred_fallthru
      _
    %v23 = vld [vmem:[#allocation2] sm:$0xff]
    %v24 = vld [vmem:[#allocation2 + $0x8] sm:$0xff]
    %vm25 = vcmp.gt.f32.partialorder %v23, 1.0
    %vm26 = vcmp.gt.f32.partialorder %v24, 1.0
    %v27 = vmax.f32 %v23, 0.0
    %v28 = vmax.f32 %v24, 0.0
    %v29 = vsel %vm25, 0.0, %v27
    %v30 = vsel %vm26, 0.0, %v28
    %31 = vst [vmem:[#allocation5] sm:$0xff] %v29
    %32 = vst [vmem:[#allocation5 + $0x8] sm:$0xff] %v30
    // Predicated region
    $region10: #{tpu_custom_call.1} parent=1 // pred_check
      _
    $region11: #{tpu_custom_call.1} parent=1 // pred_check_branch
      %34 = sbr.rel (0) target = $region13
    $region12: #{tpu_custom_call.1} parent=1 // pred_region
      %s36 = ssub.s32 256, 256
      %37 = vsyncadd [#allocation4], %s36
      %s38 = sshll.u32 [#allocation5], 4
      %s39 = int_to_ptr.vmem [resolvable:$true] %s38
      %44 = dma.vmem_to_hbm [thread:$0]  %s39, 256, %s1, [#allocation4], 128, 128, 8
    $region13: #{tpu_custom_call.1} parent=1 // pred_fallthru
      _
    // Predicated region
    $region14: #{tpu_custom_call.1} parent=1 // pred_check
      _
    $region15: #{tpu_custom_call.1} parent=1 // pred_check_branch
      %46 = sbr.rel (0) target = $region17
    $region16: #{tpu_custom_call.1} parent=1 // pred_region
      %47 = dma.done [#allocation4], 256
    $region17: #{tpu_custom_call.1} parent=1 // pred_fallthru
      _
    %48 = vsyncpa [#allocation3], 1
    %49 = vsyncpa [#allocation4], 1

</llo_original>
